<compile_context>
chip_gen: v6e
topology: v6e:2x2x1
jax: 0.10.0
libtpu: 0.0.40
codegen_flags: <defaults>
</compile_context>

<pallas_src>
import functools

import jax
import jax.numpy as jnp
from jax.experimental import pallas as pl
from jax.experimental.pallas import tpu as pltpu


LANE = 128          # vreg lane width  (last-dim alignment)
SUBLANE_BF16 = 16   # bf16 packs 16 rows per sublane-vreg -> pad batch to 16
NEG_SLOPE = 0.01    # torch.nn.functional.leaky_relu default


def _round_up(x, m):
    return (x + m - 1) // m * m


# ---------------------------------------------------------------------------
# Kernel: one grid step == one linear layer of the fused encode->decode chain.
#   x_ref : (Bp, Fp)          padded input activations (resident, read at l=0)
#   w_ref : (1, Fp, Fp) bf16  layer-l transposed, zero-padded weights
#   b_ref : (Lp, Fp)   f32    all biases, zero-padded (tiny, fully resident)
#   o_ref : (Bp, Fp)          padded reconstruction (written at last layer)
#   h_ref : (Bp, Fp)   f32    VMEM scratch carrying activations across layers
# ---------------------------------------------------------------------------
def _ae_layer_kernel(x_ref, w_ref, b_ref, o_ref, h_ref, *, n_layers, n_total):
    l = pl.program_id(0)

    @pl.when(l == 0)
    def _():
        h_ref[...] = x_ref[...].astype(jnp.float32)

    w = w_ref[0]                              # (Fp, Fp) bf16, MXU-native
    b = b_ref[pl.ds(l, 1), :]                 # (1, Fp) f32
    h = jnp.dot(h_ref[...].astype(jnp.bfloat16), w,
                preferred_element_type=jnp.float32) + b   # f32 epilogue

    # LeakyReLU on every layer except the encoder-last (linear_embedded=True)
    # and the decoder-last (linear_decoder_last=True).
    is_linear = jnp.logical_or(l == n_layers - 1, l == n_total - 1)
    h = jnp.where(jnp.logical_or(h >= 0.0, is_linear), h, NEG_SLOPE * h)
    h_ref[...] = h

    @pl.when(l == n_total - 1)
    def _():
        o_ref[...] = h.astype(o_ref.dtype)


# ---------------------------------------------------------------------------
# Jitted forward wrapper: pad -> single fused pallas_call -> slice.
# ---------------------------------------------------------------------------
def _forward_impl(x, ws, bs, *, fin, fp, n_layers, n_total, l_pad,
                  layer_dims_exec):
    B = x.shape[0]
    bp = _round_up(B, SUBLANE_BF16)
    x_pad = jnp.zeros((bp, fp), jnp.float32).at[:B, :fin].set(
        x.astype(jnp.float32))

    # Cost estimate with true (unpadded) dims.
    flops = 2 * B * sum(di * do for di, do in layer_dims_exec)
    bytes_accessed = (4 * B * fin                                  # input
                      + 4 * B * layer_dims_exec[-1][1]             # output
                      + 2 * sum(di * do for di, do in layer_dims_exec)  # bf16 W
                      + 4 * sum(do for _, do in layer_dims_exec))       # biases

    # Explicit VMEM budget (double-buffered weight tile + resident slabs).
    vmem_need = (2 * 2 * fp * fp        # 2 x bf16 weight tile
                 + 2 * l_pad * fp * 4   # bias slab
                 + 2 * bp * fp * 4      # x (resident)
                 + 2 * bp * fp * 4      # output (resident)
                 + bp * fp * 4)         # h scratch
    vmem_limit = int(min(100 << 20, max(2 * vmem_need, 8 << 20)))

    out_pad = pl.pallas_call(
        functools.partial(_ae_layer_kernel, n_layers=n_layers, n_total=n_total),
        out_shape=jax.ShapeDtypeStruct((bp, fp), x.dtype),
        grid_spec=pltpu.PrefetchScalarGridSpec(
            num_scalar_prefetch=0,
            grid=(n_total,),
            in_specs=[
                pl.BlockSpec((bp, fp), lambda l: (0, 0)),        # x (resident)
                pl.BlockSpec((1, fp, fp), lambda l: (l, 0, 0)),  # layer-l W
                pl.BlockSpec((l_pad, fp), lambda l: (0, 0)),     # all biases
            ],
            out_specs=pl.BlockSpec((bp, fp), lambda l: (0, 0)),  # accumulator
            scratch_shapes=[pltpu.VMEM((bp, fp), jnp.float32)],  # carried h
        ),
        compiler_params=pltpu.CompilerParams(
            dimension_semantics=("arbitrary",),
            vmem_limit_bytes=vmem_limit),
        cost_estimate=pl.CostEstimate(
            flops=flops, transcendentals=0, bytes_accessed=bytes_accessed),
    )(x_pad, ws, bs)

    return out_pad[:B, :fin]


# ---------------------------------------------------------------------------
# StackedAE (untied weights, linear_embedded=True, linear_decoder_last=True)
# ---------------------------------------------------------------------------
class StackedAEPallas:
    def __init__(self, layers, key, bias_init=0.0, dtype=jnp.float32):
        self.layers = list(layers)
        feature_dim = layers[0]
        layer_dims = list(layers[1:])
        self.n_layers = len(layer_dims)
        self.n_total = 2 * self.n_layers
        self.dtype = dtype

        layer_params = list(zip([feature_dim] + layer_dims[:-1], layer_dims))

        # ---- raw parameters (PyTorch (out, in) layout) ----------------------
        self.enc_w, self.enc_b = [], []
        dec_w, dec_b = [], []
        for (fin_l, fout_l) in layer_params:
            key, k1, k2 = jax.random.split(key, 3)
            # kaiming_normal_ (fan_in, leaky_relu a=0) -> std = sqrt(2/fan_in)
            ew = jax.random.normal(k1, (fout_l, fin_l), dtype) * jnp.sqrt(2.0 / fin_l)
            dw = jax.random.normal(k2, (fin_l, fout_l), dtype) * jnp.sqrt(2.0 / fout_l)
            self.enc_w.append(ew)
            self.enc_b.append(jnp.full((fout_l,), bias_init, dtype))
            dec_w.append(dw)
            dec_b.append(jnp.full((fin_l,), bias_init, dtype))
        # mirror the PyTorch module: decoder lists are reversed
        self.dec_w = dec_w[::-1]
        self.dec_b = dec_b[::-1]

        # ---- hoisted kernel-side params (padded, transposed, stacked) -------
        # TODO(synk): per-layer 128-multiple padding instead of uniform max.
        self.f_pad = _round_up(max(self.layers), LANE)
        fp = self.f_pad
        self.l_pad = _round_up(self.n_total, 8)

        ordered_w = self.enc_w + self.dec_w          # forward execution order
        ordered_b = self.enc_b + self.dec_b
        ws_padded = []
        bs_slab = jnp.zeros((self.l_pad, fp), jnp.float32)
        self.layer_dims_exec = []
        for i, (w, b) in enumerate(zip(ordered_w, ordered_b)):
            fout_l, fin_l = w.shape
            self.layer_dims_exec.append((fin_l, fout_l))
            wt = jnp.zeros((fp, fp), jnp.float32).at[:fin_l, :fout_l].set(
                w.T.astype(jnp.float32))
            ws_padded.append(wt.astype(jnp.bfloat16))    # MXU-native weights
            bs_slab = bs_slab.at[i, :fout_l].set(b.astype(jnp.float32))
        self.ws_stacked = jnp.stack(ws_padded)           # (n_total, fp, fp) bf16
        self.bs_stacked = bs_slab                        # (l_pad, fp) f32

        self._fwd = jax.jit(functools.partial(
            _forward_impl,
            fin=feature_dim, fp=fp,
            n_layers=self.n_layers, n_total=self.n_total, l_pad=self.l_pad,
            layer_dims_exec=tuple(self.layer_dims_exec)))

    def forward(self, x):
        assert x.shape[-1] == self.layers[0]
        return self._fwd(x, self.ws_stacked, self.bs_stacked)


# ---------------------------------------------------------------------------
# Pure-JAX reference with matching numerics (bf16 matmul inputs, f32 acc).
# ---------------------------------------------------------------------------
def _ref_forward(model, x):
    def lrelu(v):
        return jnp.where(v >= 0, v, NEG_SLOPE * v)

    def bf16_dot(h, w_t):
        return jnp.dot(h.astype(jnp.bfloat16), w_t.astype(jnp.bfloat16),
                       preferred_element_type=jnp.float32)

    h = x.astype(jnp.float32)
    for l in range(model.n_layers):
        h = bf16_dot(h, model.enc_w[l].T) + model.enc_b[l]
        if l != model.n_layers - 1:
            h = lrelu(h)
    r = h
    for l in range(model.n_layers):
        r = bf16_dot(r, model.dec_w[l].T) + model.dec_b[l]
        if l != model.n_layers - 1:
            r = lrelu(r)
    return r


if __name__ == "__main__":
    key = jax.random.PRNGKey(0)
    k_param, k_data = jax.random.split(key)

    layers = [32, 24, 16, 8]          # [feature_dim, hidden..., embedding]
    batch = 8

    model = StackedAEPallas(layers, k_param)
    x = jax.random.normal(k_data, (batch, layers[0]), jnp.float32)

    out = jax.block_until_ready(model.forward(x))

    ref = _ref_forward(model, x)
    assert out.shape == (batch, layers[0])
    assert jnp.allclose(out, ref, atol=1e-3, rtol=1e-3), \
        float(jnp.max(jnp.abs(out - ref)))

    print("KERNEL_OK")
</pallas_src>

<mosaic_0001>
module attributes {stable_mosaic.version = 11 : i64} {
  func.func @_ae_layer_kernel(%arg0: i32, %arg1: memref<16x128xf32, #tpu.memory_space<vmem>>, %arg2: memref<1x128x128xbf16, #tpu.memory_space<vmem>>, %arg3: memref<8x128xf32, #tpu.memory_space<vmem>>, %arg4: memref<16x128xf32, #tpu.memory_space<vmem>>, %arg5: memref<16x128xf32, #tpu.memory_space<vmem>>) attributes {dimension_semantics = [#tpu.dimension_semantics<arbitrary>], iteration_bounds = array<i64: 6>, scalar_prefetch = 0 : i64, scratch_operands = 1 : i64, tpu.core_type = #tpu.core_type<tc>, window_params = [{pipeline_mode = #tpu.pipeline_mode<synchronous>, transform_indices = @transform_0, window_bounds = array<i64: 16, 128>}, {transform_indices = @transform_1, window_bounds = array<i64: 1, 128, 128>}, {pipeline_mode = #tpu.pipeline_mode<synchronous>, transform_indices = @transform_2, window_bounds = array<i64: 8, 128>}, {pipeline_mode = #tpu.pipeline_mode<synchronous>, transform_indices = @transform_3, window_bounds = array<i64: 16, 128>}]} {
    %c0_i32 = arith.constant 0 : i32
    %0 = arith.cmpi eq, %arg0, %c0_i32 : i32
    %1 = arith.extui %0 : i1 to i32
    %c0_i32_0 = arith.constant 0 : i32
    %2 = arith.cmpi ne, %1, %c0_i32_0 : i32
    scf.if %2 {
      %c0_12 = arith.constant 0 : index
      %c0_13 = arith.constant 0 : index
      %26 = vector.load %arg1[%c0_12, %c0_13] : memref<16x128xf32, #tpu.memory_space<vmem>>, vector<16x128xf32>
      %c0_14 = arith.constant 0 : index
      %c0_15 = arith.constant 0 : index
      %27 = vector.load %arg5[%c0_14, %c0_15] : memref<16x128xf32, #tpu.memory_space<vmem>>, vector<16x128xf32>
      tpu.vector_store %arg5[%c0_14, %c0_15], %26 {strides = array<i32>} : memref<16x128xf32, #tpu.memory_space<vmem>>, vector<16x128xf32>,
    } else {
    }
    %c0 = arith.constant 0 : index
    %c0_1 = arith.constant 0 : index
    %c0_2 = arith.constant 0 : index
    %3 = vector.load %arg2[%c0, %c0_1, %c0_2] : memref<1x128x128xbf16, #tpu.memory_space<vmem>>, vector<1x128x128xbf16>
    %4 = vector.shape_cast %3 : vector<1x128x128xbf16> to vector<128x128xbf16>
    %5 = arith.index_cast %arg0 : i32 to index
    %c0_3 = arith.constant 0 : index
    %6 = vector.load %arg3[%5, %c0_3] : memref<8x128xf32, #tpu.memory_space<vmem>>, vector<1x128xf32>
    %c0_4 = arith.constant 0 : index
    %c0_5 = arith.constant 0 : index
    %7 = vector.load %arg5[%c0_4, %c0_5] : memref<16x128xf32, #tpu.memory_space<vmem>>, vector<16x128xf32>
    %8 = arith.truncf %7 : vector<16x128xf32> to vector<16x128xbf16>
    %cst = arith.constant dense<0.000000e+00> : vector<16x128xf32>
    %9 = tpu.matmul %8, %4, %cst {dimension_numbers = #tpu.dot_dimension_numbers<[1], [0], [0], [1], [0, 0, 1, 1], [], []>} : vector<16x128xbf16>, vector<128x128xbf16>, vector<16x128xf32> -> vector<16x128xf32>
    %10 = vector.broadcast %6 : vector<1x128xf32> to vector<16x128xf32>
    %11 = arith.addf %9, %10 : vector<16x128xf32>
    %c2_i32 = arith.constant 2 : i32
    %12 = arith.cmpi eq, %arg0, %c2_i32 : i32
    %c5_i32 = arith.constant 5 : i32
    %13 = arith.cmpi eq, %arg0, %c5_i32 : i32
    %14 = arith.ori %12, %13 : i1
    %cst_6 = arith.constant 0.000000e+00 : f32
    %15 = vector.broadcast %cst_6 : f32 to vector<16x128xf32>
    %16 = arith.cmpf oge, %11, %15 : vector<16x128xf32>
    %17 = vector.broadcast %14 : i1 to vector<16x128xi1>
    %18 = arith.ori %16, %17 : vector<16x128xi1>
    %cst_7 = arith.constant 0.00999999977 : f32
    %19 = vector.broadcast %cst_7 : f32 to vector<16x128xf32>
    %20 = arith.mulf %19, %11 : vector<16x128xf32>
    %21 = arith.select %18, %11, %20 : vector<16x128xi1>, vector<16x128xf32>
    %c0_8 = arith.constant 0 : index
    %c0_9 = arith.constant 0 : index
    %22 = vector.load %arg5[%c0_8, %c0_9] : memref<16x128xf32, #tpu.memory_space<vmem>>, vector<16x128xf32>
    tpu.vector_store %arg5[%c0_8, %c0_9], %21 {strides = array<i32>} : memref<16x128xf32, #tpu.memory_space<vmem>>, vector<16x128xf32>,
    %c5_i32_10 = arith.constant 5 : i32
    %23 = arith.cmpi eq, %arg0, %c5_i32_10 : i32
    %24 = arith.extui %23 : i1 to i32
    %c0_i32_11 = arith.constant 0 : i32
    %25 = arith.cmpi ne, %24, %c0_i32_11 : i32
    scf.if %25 {
      %c0_12 = arith.constant 0 : index
      %c0_13 = arith.constant 0 : index
      %26 = vector.load %arg4[%c0_12, %c0_13] : memref<16x128xf32, #tpu.memory_space<vmem>>, vector<16x128xf32>
      tpu.vector_store %arg4[%c0_12, %c0_13], %21 {strides = array<i32>} : memref<16x128xf32, #tpu.memory_space<vmem>>, vector<16x128xf32>,
    } else {
    }
    return
  }
  func.func @transform_0(%arg0: i32) -> (i32, i32) {
    %c0_i32 = arith.constant 0 : i32
    %c0_i32_0 = arith.constant 0 : i32
    %c0_i32_1 = arith.constant 0 : i32
    return %c0_i32, %c0_i32_0 : i32, i32
  }
  func.func @transform_1(%arg0: i32) -> (i32, i32, i32) {
    %c0_i32 = arith.constant 0 : i32
    %c0_i32_0 = arith.constant 0 : i32
    %c0_i32_1 = arith.constant 0 : i32
    return %arg0, %c0_i32, %c0_i32_0 : i32, i32, i32
  }
  func.func @transform_2(%arg0: i32) -> (i32, i32) {
    %c0_i32 = arith.constant 0 : i32
    %c0_i32_0 = arith.constant 0 : i32
    %c0_i32_1 = arith.constant 0 : i32
    return %c0_i32, %c0_i32_0 : i32, i32
  }
  func.func @transform_3(%arg0: i32) -> (i32, i32) {
    %c0_i32 = arith.constant 0 : i32
    %c0_i32_0 = arith.constant 0 : i32
    %c0_i32_1 = arith.constant 0 : i32
    return %c0_i32, %c0_i32_0 : i32, i32
  }
}

</mosaic_0001>

<llo_original>
// kernel: _forward_impl.1
$region0: #{_forward_impl.1}
  #allocation0 [shape = 'u32[]', space=smem, size = 0x4, offset = 0x4, fixed_abs, tag = 'smem constant byte address 0x4 - core index']
  #allocation1 [shape = 'u32[144,128]{1,0:T(1,128)}', space=vmem, size = 0x12000, scoped, tag = 'internal scratch']
  #allocation2 [shape = 'f32[16,128]{1,0:T(8,128)}', space=vmem, size = 0x2000, scoped, tag = 'scratch operand']
  %s0 = inlined_call_operand.vmem [shape: f32[16,128], index: 0, kind: input, shape index: {}]
  %s1 = inlined_call_operand.hbm [shape: bf16[6,128,128], index: 1, kind: input, shape index: {}]
  %s2 = inlined_call_operand.vmem [shape: f32[8,128], index: 2, kind: input, shape index: {}]
  %s3 = inlined_call_operand.vmem [shape: f32[16,128], index: 3, kind: output, shape index: {}]
  %s4 = sld [smem:[#allocation0]]
  $region57: #{_forward_impl.1} parent=0
    _
  %s6 = ssub.s32 1, %s4
  %s7 = scalar_select 0, %s6, %s4
  $region1: #{_forward_impl.1} parent=0
    #allocation3 [shape = 'u8[65536]{0}', space=vmem, size = 0x10000, scoped, tag = 'input window, operand 1']
    #allocation4 [shape = 's32[2]{0}', space=sflag, size = 0x8, scoped, tag = 'scoped memory for _forward_impl.1']
    %8 = vsyncpa [#allocation4], 0
    %s9 = scalar_lea.sflag [#allocation4], 1
    %10 = vsyncpa %s9, 0
    loop: start=0, step=1, limit=8
    $region2: #{_forward_impl.1} parent=1 // loop_pre_header
      _
    $region3: #{_forward_impl.1} parent=1 // loop_header
      %s12 = sphi 0, %s16
      %p13 = scmp.ge.s32.totalorder %s12, 8
      %s20 = sphi 0, %s20
      %s22 = sphi 0, %s20
      %s23 = sphi 0, %s22
      %s37 = sphi 0, %s23
      %s43 = sphi 0, %s45
      %s46 = sphi 0, %s43
      %s47 = sphi 0, %s46
      %s63 = sphi 0, %s47
      %s67 = sphi 0, %s67
      %s69 = sphi 0, %s67
      %s70 = sphi 0, %s69
      %s84 = sphi 0, %s70
      %s88 = sphi 0, %s88
      %s90 = sphi 0, %s88
      %s91 = sphi 0, %s90
      %s105 = sphi 0, %s91
    $region4: #{_forward_impl.1} parent=1 // loop_header_branch
      %15 = sbr.rel (%p13) target = $region8
    $region5: #{_forward_impl.1} parent=1 // loop_body
      %s17 = ssub.s32 %s12, 1
      %s18 = ssub.s32 %s12, 2
      %s19 = sadd.s32 %s12, 1
      %s21 = sadd.s32 %s20, 1
      %p24 = scmp.eq.s32.totalorder %s12, 5
      %p25 = scmp.ne.s32.totalorder %s20, %s22
      %p26 = scmp.eq.s32.totalorder %s12, 0
      %p27 = por %p25, %p26
      %p28 = scmp.ne.s32.totalorder %s20, %s22
      %p29 = scmp.eq.s32.totalorder %s17, 5
      %p30 = por %p28, %p29
      %p31 = scmp.ne.s32.totalorder %s22, %s23
      %p32 = scmp.eq.s32.totalorder %s17, 0
      %p33 = por %p31, %p32
      %p34 = scmp.ne.s32.totalorder %s22, %s23
      %p35 = scmp.eq.s32.totalorder %s18, 5
      %p36 = por %p34, %p35
      %p38 = scmp.ne.s32.totalorder %s23, %s37
      %p39 = scmp.eq.s32.totalorder %s18, 0
      %p40 = por %p38, %p39
      %s41 = ssub.s32 %s12, %s19
      %p42 = scmp.eq.s32.totalorder %s41, 0
      %s44 = sadd.s32 %s43, 1
      %s45 = scalar_select %p42, %s43, %s44
      %p48 = pneg %p42
      %p49 = scmp.eq.s32.totalorder %s12, 5
      %p50 = por %p48, %p49
      %p51 = scmp.ne.s32.totalorder %s43, %s46
      %p52 = scmp.eq.s32.totalorder %s12, 0
      %p53 = por %p51, %p52
      %p54 = scmp.ne.s32.totalorder %s43, %s46
      %p55 = scmp.eq.s32.totalorder %s17, 5
      %p56 = por %p54, %p55
      %p57 = scmp.ne.s32.totalorder %s46, %s47
      %p58 = scmp.eq.s32.totalorder %s17, 0
      %p59 = por %p57, %p58
      %p60 = scmp.ne.s32.totalorder %s46, %s47
      %p61 = scmp.eq.s32.totalorder %s18, 5
      %p62 = por %p60, %p61
      %p64 = scmp.ne.s32.totalorder %s47, %s63
      %p65 = scmp.eq.s32.totalorder %s18, 0
      %p66 = por %p64, %p65
      %s68 = sadd.s32 %s67, 1
      %p71 = scmp.eq.s32.totalorder %s12, 5
      %p72 = scmp.ne.s32.totalorder %s67, %s69
      %p73 = scmp.eq.s32.totalorder %s12, 0
      %p74 = por %p72, %p73
      %p75 = scmp.ne.s32.totalorder %s67, %s69
      %p76 = scmp.eq.s32.totalorder %s17, 5
      %p77 = por %p75, %p76
      %p78 = scmp.ne.s32.totalorder %s69, %s70
      %p79 = scmp.eq.s32.totalorder %s17, 0
      %p80 = por %p78, %p79
      %p81 = scmp.ne.s32.totalorder %s69, %s70
      %p82 = scmp.eq.s32.totalorder %s18, 5
      %p83 = por %p81, %p82
      %p85 = scmp.ne.s32.totalorder %s70, %s84
      %p86 = scmp.eq.s32.totalorder %s18, 0
      %p87 = por %p85, %p86
      %s89 = sadd.s32 %s88, 1
      %p92 = scmp.eq.s32.totalorder %s12, 5
      %p93 = scmp.ne.s32.totalorder %s88, %s90
      %p94 = scmp.eq.s32.totalorder %s12, 0
      %p95 = por %p93, %p94
      %p96 = scmp.ne.s32.totalorder %s88, %s90
      %p97 = scmp.eq.s32.totalorder %s17, 5
      %p98 = por %p96, %p97
      %p99 = scmp.ne.s32.totalorder %s90, %s91
      %p100 = scmp.eq.s32.totalorder %s17, 0
      %p101 = por %p99, %p100
      %p102 = scmp.ne.s32.totalorder %s90, %s91
      %p103 = scmp.eq.s32.totalorder %s18, 5
      %p104 = por %p102, %p103
      %p106 = scmp.ne.s32.totalorder %s91, %s105
      %p107 = scmp.eq.s32.totalorder %s18, 0
      %p108 = por %p106, %p107
      %p109 = scmp.le.s32.totalorder 1, %s12
      %p110 = scmp.lt.s32.totalorder %s12, 7
      %p111 = pnand %p109, %p110
      %p112 = pneg %p111
      // Predicated region
      $region9: #{_forward_impl.1} parent=5 // pred_check
        _
      $region10: #{_forward_impl.1} parent=5 // pred_check_branch
        %114 = sbr.rel (%p111) target = $region12
      $region11: #{_forward_impl.1} parent=5 // pred_region
        %s115 = ssub.s32 %s12, 1
        // Predicated region
        $region13: #{_forward_impl.1} parent=11 // pred_check
          %p116 = pneg %p33
        $region14: #{_forward_impl.1} parent=11 // pred_check_branch
          %118 = sbr.rel (%p116) target = $region16
        $region15: #{_forward_impl.1} parent=11 // pred_region
          _
        $region16: #{_forward_impl.1} parent=11 // pred_fallthru
          _
        // Predicated region
        $region17: #{_forward_impl.1} parent=11 // pred_check
          %p119 = pneg %p80
        $region18: #{_forward_impl.1} parent=11 // pred_check_branch
          %121 = sbr.rel (%p119) target = $region20
        $region19: #{_forward_impl.1} parent=11 // pred_region
          _
        $region20: #{_forward_impl.1} parent=11 // pred_fallthru
          _
      $region12: #{_forward_impl.1} parent=5 // pred_fallthru
        _
      %p122 = scmp.lt.s32.totalorder %s12, 6
      // Predicated region
      $region21: #{_forward_impl.1} parent=5 // pred_check
        %p123 = pneg %p122
      $region22: #{_forward_impl.1} parent=5 // pred_check_branch
        %125 = sbr.rel (%p123) target = $region24
      $region23: #{_forward_impl.1} parent=5 // pred_region
        // Predicated region
        $region25: #{_forward_impl.1} parent=23 // pred_check
          %p126 = pneg %p53
        $region26: #{_forward_impl.1} parent=23 // pred_check_branch
          %128 = sbr.rel (%p126) target = $region28
        $region27: #{_forward_impl.1} parent=23 // pred_region
          %s129 = sand.u32 %s43, 1
          %s130 = scalar_lea.sflag [#allocation4], %s129
          %s131 = sand.u32 %s43, 1
          %s132 = smul.addr %s131, 64
          %s133 = scalar_lea.vmem [#allocation3], %s132
          %s135 = ssub.s32 1024, 1024
          %136 = vsyncadd %s130, %s135
          %s137 = smul.addr %s12, 16
          %s138 = smul.addr %s137, 64
          %s139 = scalar_lea.hbm %s1, %s138
          %s140 = sshll.u32 %s133, 4
          %s141 = int_to_ptr.vmem [resolvable:$true] %s140
          %146 = dma.hbm_to_vmem [thread:$0]  %s139, 1024, %s141, %s130, 64, 64, 4
        $region28: #{_forward_impl.1} parent=23 // pred_fallthru
          _
      $region24: #{_forward_impl.1} parent=5 // pred_fallthru
        _
      %p147 = scmp.le.s32.totalorder 1, %s12
      %p148 = scmp.lt.s32.totalorder %s12, 7
      %p149 = pnand %p147, %p148
      %p150 = pneg %p149
      // Predicated region
      $region29: #{_forward_impl.1} parent=5 // pred_check
        _
      $region30: #{_forward_impl.1} parent=5 // pred_check_branch
        %152 = sbr.rel (%p149) target = $region32
      $region31: #{_forward_impl.1} parent=5 // pred_region
        %s153 = ssub.s32 %s12, 1
        %s154 = sand.u32 %s46, 1
        %s155 = scalar_lea.sflag [#allocation4], %s154
        %s156 = sand.u32 %s46, 1
        %s157 = smul.addr %s156, 64
        %s158 = scalar_lea.vmem [#allocation3], %s157
        // Predicated region
        $region33: #{_forward_impl.1} parent=31 // pred_check
          %p159 = pneg %p59
        $region34: #{_forward_impl.1} parent=31 // pred_check_branch
          %161 = sbr.rel (%p159) target = $region36
        $region35: #{_forward_impl.1} parent=31 // pred_region
          %162 = dma.done %s155, 1024
        $region36: #{_forward_impl.1} parent=31 // pred_fallthru
          _
        %p163 = pneg %p33
        %p164 = pneg %p30
        %s165 = sand.u32 %s46, 1
        %s166 = scalar_lea.sflag [#allocation4], %s165
        %s167 = sand.u32 %s46, 1
        %s168 = smul.addr %s167, 64
        %s169 = scalar_lea.vmem [#allocation3], %s168
        %p170 = pneg %p59
        %p171 = pneg %p56
        %p172 = pneg %p80
        %p173 = pneg %p77
        %p174 = pneg %p101
        %p175 = pneg %p98
        %p177 = scmp.eq.s32.totalorder %s17, 0
        // Predicated region
        $region37: #{_forward_impl.1} parent=31 // pred_check
          %p178 = pneg %p177
        $region38: #{_forward_impl.1} parent=31 // pred_check_branch
          %180 = sbr.rel (%p178) target = $region40
        $region39: #{_forward_impl.1} parent=31 // pred_region
          %v181 = vld [vmem:[%s0] sm:$0xff]
          %v182 = vld [vmem:[%s0 + $0x8] sm:$0xff]
          %183 = vst [vmem:[#allocation2] sm:$0xff] %v181
          %184 = vst [vmem:[#allocation2 + $0x8] sm:$0xff] %v182
        $region40: #{_forward_impl.1} parent=31 // pred_fallthru
          _
        %v185 = vld [vmem:[%s158] sm:$0xf]
        %v186 = vld [vmem:[%s158 + $0x4] sm:$0xf]
        %v187 = vld [vmem:[%s158 + $0x8] sm:$0xf]
        %v188 = vld [vmem:[%s158 + $0xc] sm:$0xf]
        %v189 = vld [vmem:[%s158 + $0x10] sm:$0xf]
        %v190 = vld [vmem:[%s158 + $0x14] sm:$0xf]
        %v191 = vld [vmem:[%s158 + $0x18] sm:$0xf]
        %v192 = vld [vmem:[%s158 + $0x1c] sm:$0xf]
        %v193 = vld [vmem:[%s158 + $0x20] sm:$0xf]
        %v194 = vld [vmem:[%s158 + $0x24] sm:$0xf]
        %v195 = vld [vmem:[%s158 + $0x28] sm:$0xf]
        %v196 = vld [vmem:[%s158 + $0x2c] sm:$0xf]
        %v197 = vld [vmem:[%s158 + $0x30] sm:$0xf]
        %v198 = vld [vmem:[%s158 + $0x34] sm:$0xf]
        %v199 = vld [vmem:[%s158 + $0x38] sm:$0xf]
        %v200 = vld [vmem:[%s158 + $0x3c] sm:$0xf]
        %s201 = scalar_lea.vmem %s2, %s17
        %v202 = vld [vmem:[%s201] sm:$0x1]
        %v203 = vld [vmem:[#allocation2] sm:$0xff]
        %v204 = vld [vmem:[#allocation2 + $0x8] sm:$0xff]
        %v205 = vpack.c.bf16 %v204, %v203
        %v206 = vlaneseq
        %v207 = vshrl.u32 %v206, 7
        %v208 = vsub.s32 0, %v207
        %v209 = vrot.slane %v202, %v208
        %v226 = vunpack.c.l.b16 %v185
        %v227 = vunpack.c.l.b16 %v186
        %v228 = vunpack.c.l.b16 %v187
        %v229 = vunpack.c.l.b16 %v188
        %v230 = vunpack.c.l.b16 %v189
        %v231 = vunpack.c.l.b16 %v190
        %v232 = vunpack.c.l.b16 %v191
        %v233 = vunpack.c.l.b16 %v192
        %v234 = vunpack.c.l.b16 %v193
        %v235 = vunpack.c.l.b16 %v194
        %v236 = vunpack.c.l.b16 %v195
        %v237 = vunpack.c.l.b16 %v196
        %v238 = vunpack.c.l.b16 %v197
        %v239 = vunpack.c.l.b16 %v198
        %v240 = vunpack.c.l.b16 %v199
        %v241 = vunpack.c.l.b16 %v200
        %v242 = vpack.c.b16 %v227, %v226
        %v243 = vpack.c.b16 %v229, %v228
        %v244 = vpack.c.b16 %v231, %v230
        %v245 = vpack.c.b16 %v233, %v232
        %v246 = vpack.c.b16 %v235, %v234
        %v247 = vpack.c.b16 %v237, %v236
        %v248 = vpack.c.b16 %v239, %v238
        %v249 = vpack.c.b16 %v241, %v240
        %258 = vmatprep.subr.bf16.mxu0 0
        %259 = vmatpush1.bf16.msra.mxu0 %v249
        %260 = vmatprep.subr.bf16.mxu0 0
        %261 = vmatpush1.bf16.msra.mxu0 %v248
        %262 = vmatprep.subr.bf16.mxu0 0
        %263 = vmatpush1.bf16.msra.mxu0 %v247
        %264 = vmatprep.subr.bf16.mxu0 0
        %265 = vmatpush1.bf16.msra.mxu0 %v246
        %266 = vmatprep.subr.bf16.mxu0 0
        %267 = vmatpush1.bf16.msra.mxu0 %v245
        %268 = vmatprep.subr.bf16.mxu0 0
        %269 = vmatpush1.bf16.msra.mxu0 %v244
        %270 = vmatprep.subr.bf16.mxu0 0
        %271 = vmatpush1.bf16.msra.mxu0 %v243
        %272 = vmatprep.subr.bf16.mxu0 0
        %273 = vmatpush1.bf16.msra.mxu0 %v242
        %274 = vmatprep.subr.bf16.mxu0 0
        %275 = vmatpush2.bf16.msra.mxu0 0
        %276 = vmatprep.subr.bf16.mxu0 0
        %277 = vmatpush2.bf16.msra.mxu0 0
        %278 = vmatprep.subr.bf16.mxu0 0
        %279 = vmatpush2.bf16.msra.mxu0 0
        %280 = vmatprep.subr.bf16.mxu0 0
        %281 = vmatpush2.bf16.msra.mxu0 0
        %282 = vmatprep.subr.bf16.mxu0 0
        %283 = vmatpush2.bf16.msra.mxu0 0
        %284 = vmatprep.subr.bf16.mxu0 0
        %285 = vmatpush2.bf16.msra.mxu0 0
        %286 = vmatprep.subr.bf16.mxu0 0
        %287 = vmatpush2.bf16.msra.mxu0 0
        %288 = vmatprep.subr.bf16.mxu0 0
        %289 = vmatpush2.bf16.msra.mxu0 0
        %290 = vmatprep.mubr.bf16.mxu0 0
        %291 = vmatmul.mubr.bf16.gmra.mxu0 %v205
        %v292 = vpop.f32.mrf.mxu0
        %v293 = vadd.f32 %v209, %v292
        %v294 = vpop.f32.mrf.mxu0
        %v295 = vpop.f32.mrf.mxu0
        %v296 = vadd.f32 %v209, %v295
        %v297 = vpop.f32.mrf.mxu0
        %298 = vdwg.mxu0
        %p299 = scmp.eq.s32.totalorder %s17, 2
        %p300 = scmp.eq.s32.totalorder %s17, 5
        %p301 = por %p299, %p300
        %vm302 = vcmp.ge.f32.partialorder %v293, 0.0
        %vm303 = vcmp.ge.f32.partialorder %v296, 0.0
        %s304 = scalar_select %p301, 1, 0
        %v305 = vstv %s304
        %vm306 = vcmp.eq.s32.totalorder %v305, 1
        %vm307 = vmor %vm302, %vm306
        %vm308 = vmor %vm303, %vm306
        %v309 = vmul.f32 %v293, 0.01
        %v310 = vmul.f32 %v296, 0.01
        %v311 = vsel %vm307, %v293, %v309
        %v312 = vsel %vm308, %v296, %v310
        %313 = vst [vmem:[#allocation2] sm:$0xff] %v311
        %314 = vst [vmem:[#allocation2 + $0x8] sm:$0xff] %v312
        // Predicated region
        $region41: #{_forward_impl.1} parent=31 // pred_check
          %p315 = pneg %p300
        $region42: #{_forward_impl.1} parent=31 // pred_check_branch
          %317 = sbr.rel (%p315) target = $region44
        $region43: #{_forward_impl.1} parent=31 // pred_region
          %318 = vst [vmem:[%s3] sm:$0xff] %v311
          %319 = vst [vmem:[%s3 + $0x8] sm:$0xff] %v312
        $region44: #{_forward_impl.1} parent=31 // pred_fallthru
          _
        // Predicated region
        $region45: #{_forward_impl.1} parent=31 // pred_check
          %p320 = pneg %p98
        $region46: #{_forward_impl.1} parent=31 // pred_check_branch
          %322 = sbr.rel (%p320) target = $region48
        $region47: #{_forward_impl.1} parent=31 // pred_region
          _
        $region48: #{_forward_impl.1} parent=31 // pred_fallthru
          _
        // Predicated region
        $region49: #{_forward_impl.1} parent=31 // pred_check
          %p323 = pneg %p98
        $region50: #{_forward_impl.1} parent=31 // pred_check_branch
          %325 = sbr.rel (%p323) target = $region52
        $region51: #{_forward_impl.1} parent=31 // pred_region
          _
        $region52: #{_forward_impl.1} parent=31 // pred_fallthru
          _
      $region32: #{_forward_impl.1} parent=5 // pred_fallthru
        _
      %p326 = scmp.le.s32.totalorder 2, %s12
      // Predicated region
      $region53: #{_forward_impl.1} parent=5 // pred_check
        %p327 = pneg %p326
      $region54: #{_forward_impl.1} parent=5 // pred_check_branch
        %329 = sbr.rel (%p327) target = $region56
      $region55: #{_forward_impl.1} parent=5 // pred_region
        %s330 = ssub.s32 %s12, 2
      $region56: #{_forward_impl.1} parent=5 // pred_fallthru
        _
    $region6: #{_forward_impl.1} parent=1 // loop_footer
      %s16 = sadd.s32 1, %s12
    $region7: #{_forward_impl.1} parent=1 // loop_footer_branch
      %11 = sbr.rel target = $region3
    $region8: #{_forward_impl.1} parent=1 // loop_exit
      _
    %331 = vsyncpa [#allocation4], 1
    %s332 = scalar_lea.sflag [#allocation4], 1
    %333 = vsyncpa %s332, 1

</llo_original>
